<compile_context>
chip_gen: v7x
topology: tpu7x:2x2x1
jax: 0.10.0
libtpu: 0.0.40
codegen_flags: <defaults>
</compile_context>

<pallas_src>
import functools

import jax
import jax.numpy as jnp
from jax.experimental import pallas as pl
from jax.experimental.pallas import tpu as pltpu


# ---------------------------------------------------------------------------
# Kernel: per-column (lane) sum of the k smallest / largest clamped values.
# Block: x (B, TILE_N)  ->  out (1, TILE_N)
# ---------------------------------------------------------------------------
def _topk_colsum_kernel(x_ref, out_ref, *, k, largest):
    # Compute in f32 to match torch float32 semantics exactly.
    # (For bf16 inputs on v6e/v7x one could keep the compare chain in bf16;
    #  kept in f32 here for bit-for-bit agreement with the reference.)
    x = x_ref[...].astype(jnp.float32)                  # (B, T)
    B, T = x.shape
    work = jnp.maximum(x, 1e-8)                         # torch .clamp(1e-08)

    # Strictly-lower-triangular ones (B, B): (tri @ hit)[i] = #hits in rows < i.
    # Built once (outside the unrolled k loop); tiny, lives on the MXU path.
    ri = jax.lax.broadcasted_iota(jnp.int32, (B, B), 0)
    ci = jax.lax.broadcasted_iota(jnp.int32, (B, B), 1)
    tri = (ri > ci).astype(jnp.bfloat16)

    mask_val = -jnp.inf if largest else jnp.inf
    total = jnp.zeros((1, T), jnp.float32)

    for t in range(k):                                  # static, small k -> unrolled
        if largest:
            m = jnp.max(work, axis=0, keepdims=True)    # (1, T)  single XLU reduce
        else:
            m = jnp.min(work, axis=0, keepdims=True)
        total = total + m
        if t + 1 < k:
            # Mask out exactly ONE occurrence per column (lowest row among ties),
            # like torch.topk selecting k distinct elements.  The prefix hit-count
            # is an exact small-integer matmul (bf16 in, f32 acc) on the MXU.
            hit = work == m                                             # (B, T)
            n_before = jnp.dot(tri, hit.astype(jnp.bfloat16),
                               preferred_element_type=jnp.float32)      # (B, T)
            first = hit & (n_before < 0.5)
            work = jnp.where(first, mask_val, work)

    out_ref[...] = total                                # lane-dense full-width store


# ---------------------------------------------------------------------------
# Wrapper
# ---------------------------------------------------------------------------
def shapelets_distance_loss(x, *, dist_measure="euclidean", k=6, tile_n=512):
    if dist_measure not in ("euclidean", "cosine"):
        raise ValueError("Parameter 'dist_measure' must be either of 'euclidean' or 'cosine'.")
    if not isinstance(k, int):
        raise ValueError("Parameter 'k' must be an integer.")

    B, N = x.shape
    if k > B:
        raise ValueError(f"k ({k}) must not exceed the batch size ({B}).")
    largest = dist_measure == "cosine"

    # Lane tile: multiple of 128, no larger than needed / requested.
    tile = min(int(tile_n), pl.cdiv(N, 128) * 128)
    tile = max(128, (tile // 128) * 128)
    n_pad = pl.cdiv(N, tile) * tile
    xp = x if n_pad == N else jnp.pad(x, ((0, 0), (0, n_pad - N)), constant_values=1.0)

    kernel = functools.partial(_topk_colsum_kernel, k=k, largest=largest)
    col_sums = pl.pallas_call(
        kernel,
        out_shape=jax.ShapeDtypeStruct((1, n_pad), jnp.float32),
        grid=(n_pad // tile,),
        in_specs=[pl.BlockSpec((B, tile), lambda j: (0, j))],
        out_specs=pl.BlockSpec((1, tile), lambda j: (0, j)),
        compiler_params=pltpu.CompilerParams(
            dimension_semantics=("parallel",),          # independent tiles -> 2 TCs on v7x
            vmem_limit_bytes=32 * 1024 * 1024,
        ),
    )(xp)

    # Final reduction over real (unpadded) columns + the (1 - mean) branch in JAX.
    mean_top = jnp.sum(col_sums[0, :N]) / (k * N)
    return (1.0 - mean_top) if largest else mean_top


# ---------------------------------------------------------------------------
# Example / self-check
# ---------------------------------------------------------------------------
if __name__ == "__main__":
    # x is a shapelet transform of shape (batch_size, n_shapelets).
    B, N, k = 16, 300, 6        # N not a multiple of 128 -> exercises padding path
    key = jax.random.PRNGKey(0)
    x = jax.random.uniform(key, (B, N), jnp.float32, minval=0.0, maxval=4.0)
    # Inject duplicates to exercise the exact tie-handling path.
    x = x.at[3, :].set(x[7, :])

    # Kernel: default tile (single grid step) and forced multi-tile grid.
    loss_e = jax.block_until_ready(shapelets_distance_loss(x, dist_measure="euclidean", k=k))
    loss_c = jax.block_until_ready(shapelets_distance_loss(x, dist_measure="cosine", k=k))
    loss_e_mt = jax.block_until_ready(
        shapelets_distance_loss(x, dist_measure="euclidean", k=k, tile_n=128))
    loss_c_mt = jax.block_until_ready(
        shapelets_distance_loss(x, dist_measure="cosine", k=k, tile_n=128))

    # Pure-JAX references (sorted top-k; tie handling does not affect the mean).
    xc = jnp.maximum(x, 1e-8)
    xs = jnp.sort(xc, axis=0)
    ref_e = jnp.mean(xs[:k, :])
    ref_c = jnp.mean(1.0 - xs[-k:, :])

    assert loss_e.shape == () and loss_c.shape == ()
    assert bool(jnp.isfinite(loss_e)) and bool(jnp.isfinite(loss_c))
    assert bool(jnp.allclose(loss_e, ref_e, rtol=1e-5, atol=1e-6))
    assert bool(jnp.allclose(loss_c, ref_c, rtol=1e-5, atol=1e-6))
    assert bool(jnp.allclose(loss_e_mt, ref_e, rtol=1e-5, atol=1e-6))
    assert bool(jnp.allclose(loss_c_mt, ref_c, rtol=1e-5, atol=1e-6))
    print("KERNEL_OK")
</pallas_src>

<mosaic_0001>
module attributes {stable_mosaic.version = 11 : i64} {
  func.func @_topk_colsum_kernel(%arg0: i32, %arg1: memref<16x384xf32, #tpu.memory_space<vmem>>, %arg2: memref<1x384xf32, #tpu.memory_space<vmem>>) attributes {dimension_semantics = [#tpu.dimension_semantics<parallel>], iteration_bounds = array<i64: 1>, scalar_prefetch = 0 : i64, scratch_operands = 0 : i64, tpu.core_type = #tpu.core_type<tc>, window_params = [{transform_indices = @transform_0, window_bounds = array<i64: 16, 384>}, {transform_indices = @transform_1, window_bounds = array<i64: 1, 384>}]} {
    %c0 = arith.constant 0 : index
    %c0_0 = arith.constant 0 : index
    %0 = vector.load %arg1[%c0, %c0_0] : memref<16x384xf32, #tpu.memory_space<vmem>>, vector<16x384xf32>
    %cst = arith.constant 9.99999993E-9 : f32
    %1 = vector.broadcast %cst : f32 to vector<16x384xf32>
    %2 = arith.maximumf %0, %1 : vector<16x384xf32>
    %3 = tpu.iota {dimensions = array<i32: 0>} : vector<16x16xi32>
    %4 = tpu.iota {dimensions = array<i32: 1>} : vector<16x16xi32>
    %5 = arith.cmpi sgt, %3, %4 : vector<16x16xi32>
    %6 = arith.extui %5 : vector<16x16xi1> to vector<16x16xi32>
    %7 = arith.sitofp %6 : vector<16x16xi32> to vector<16x16xf32>
    %8 = arith.truncf %7 : vector<16x16xf32> to vector<16x16xbf16>
    %cst_1 = arith.constant 0.000000e+00 : f32
    %9 = vector.broadcast %cst_1 : f32 to vector<1x384xf32>
    %cst_2 = arith.constant dense<0x7F800000> : vector<384xf32>
    %10 = vector.multi_reduction <minimumf>, %2, %cst_2 [0] : vector<16x384xf32> to vector<384xf32>
    %11 = vector.shape_cast %10 : vector<384xf32> to vector<1x384xf32>
    %12 = arith.addf %9, %11 : vector<1x384xf32>
    %13 = vector.broadcast %11 : vector<1x384xf32> to vector<16x384xf32>
    %14 = arith.cmpf oeq, %2, %13 : vector<16x384xf32>
    %15 = arith.extui %14 : vector<16x384xi1> to vector<16x384xi32>
    %16 = arith.sitofp %15 : vector<16x384xi32> to vector<16x384xf32>
    %17 = arith.truncf %16 : vector<16x384xf32> to vector<16x384xbf16>
    %cst_3 = arith.constant dense<0.000000e+00> : vector<16x384xf32>
    %18 = tpu.matmul %8, %17, %cst_3 {dimension_numbers = #tpu.dot_dimension_numbers<[1], [0], [0], [1], [0, 0, 1, 1], [], []>} : vector<16x16xbf16>, vector<16x384xbf16>, vector<16x384xf32> -> vector<16x384xf32>
    %cst_4 = arith.constant 5.000000e-01 : f32
    %19 = vector.broadcast %cst_4 : f32 to vector<16x384xf32>
    %20 = arith.cmpf olt, %18, %19 : vector<16x384xf32>
    %21 = arith.andi %14, %20 : vector<16x384xi1>
    %cst_5 = arith.constant 0x7F800000 : f32
    %22 = vector.broadcast %cst_5 : f32 to vector<16x384xf32>
    %23 = arith.select %21, %22, %2 : vector<16x384xi1>, vector<16x384xf32>
    %cst_6 = arith.constant dense<0x7F800000> : vector<384xf32>
    %24 = vector.multi_reduction <minimumf>, %23, %cst_6 [0] : vector<16x384xf32> to vector<384xf32>
    %25 = vector.shape_cast %24 : vector<384xf32> to vector<1x384xf32>
    %26 = arith.addf %12, %25 : vector<1x384xf32>
    %27 = vector.broadcast %25 : vector<1x384xf32> to vector<16x384xf32>
    %28 = arith.cmpf oeq, %23, %27 : vector<16x384xf32>
    %29 = arith.extui %28 : vector<16x384xi1> to vector<16x384xi32>
    %30 = arith.sitofp %29 : vector<16x384xi32> to vector<16x384xf32>
    %31 = arith.truncf %30 : vector<16x384xf32> to vector<16x384xbf16>
    %cst_7 = arith.constant dense<0.000000e+00> : vector<16x384xf32>
    %32 = tpu.matmul %8, %31, %cst_7 {dimension_numbers = #tpu.dot_dimension_numbers<[1], [0], [0], [1], [0, 0, 1, 1], [], []>} : vector<16x16xbf16>, vector<16x384xbf16>, vector<16x384xf32> -> vector<16x384xf32>
    %cst_8 = arith.constant 5.000000e-01 : f32
    %33 = vector.broadcast %cst_8 : f32 to vector<16x384xf32>
    %34 = arith.cmpf olt, %32, %33 : vector<16x384xf32>
    %35 = arith.andi %28, %34 : vector<16x384xi1>
    %cst_9 = arith.constant 0x7F800000 : f32
    %36 = vector.broadcast %cst_9 : f32 to vector<16x384xf32>
    %37 = arith.select %35, %36, %23 : vector<16x384xi1>, vector<16x384xf32>
    %cst_10 = arith.constant dense<0x7F800000> : vector<384xf32>
    %38 = vector.multi_reduction <minimumf>, %37, %cst_10 [0] : vector<16x384xf32> to vector<384xf32>
    %39 = vector.shape_cast %38 : vector<384xf32> to vector<1x384xf32>
    %40 = arith.addf %26, %39 : vector<1x384xf32>
    %41 = vector.broadcast %39 : vector<1x384xf32> to vector<16x384xf32>
    %42 = arith.cmpf oeq, %37, %41 : vector<16x384xf32>
    %43 = arith.extui %42 : vector<16x384xi1> to vector<16x384xi32>
    %44 = arith.sitofp %43 : vector<16x384xi32> to vector<16x384xf32>
    %45 = arith.truncf %44 : vector<16x384xf32> to vector<16x384xbf16>
    %cst_11 = arith.constant dense<0.000000e+00> : vector<16x384xf32>
    %46 = tpu.matmul %8, %45, %cst_11 {dimension_numbers = #tpu.dot_dimension_numbers<[1], [0], [0], [1], [0, 0, 1, 1], [], []>} : vector<16x16xbf16>, vector<16x384xbf16>, vector<16x384xf32> -> vector<16x384xf32>
    %cst_12 = arith.constant 5.000000e-01 : f32
    %47 = vector.broadcast %cst_12 : f32 to vector<16x384xf32>
    %48 = arith.cmpf olt, %46, %47 : vector<16x384xf32>
    %49 = arith.andi %42, %48 : vector<16x384xi1>
    %cst_13 = arith.constant 0x7F800000 : f32
    %50 = vector.broadcast %cst_13 : f32 to vector<16x384xf32>
    %51 = arith.select %49, %50, %37 : vector<16x384xi1>, vector<16x384xf32>
    %cst_14 = arith.constant dense<0x7F800000> : vector<384xf32>
    %52 = vector.multi_reduction <minimumf>, %51, %cst_14 [0] : vector<16x384xf32> to vector<384xf32>
    %53 = vector.shape_cast %52 : vector<384xf32> to vector<1x384xf32>
    %54 = arith.addf %40, %53 : vector<1x384xf32>
    %55 = vector.broadcast %53 : vector<1x384xf32> to vector<16x384xf32>
    %56 = arith.cmpf oeq, %51, %55 : vector<16x384xf32>
    %57 = arith.extui %56 : vector<16x384xi1> to vector<16x384xi32>
    %58 = arith.sitofp %57 : vector<16x384xi32> to vector<16x384xf32>
    %59 = arith.truncf %58 : vector<16x384xf32> to vector<16x384xbf16>
    %cst_15 = arith.constant dense<0.000000e+00> : vector<16x384xf32>
    %60 = tpu.matmul %8, %59, %cst_15 {dimension_numbers = #tpu.dot_dimension_numbers<[1], [0], [0], [1], [0, 0, 1, 1], [], []>} : vector<16x16xbf16>, vector<16x384xbf16>, vector<16x384xf32> -> vector<16x384xf32>
    %cst_16 = arith.constant 5.000000e-01 : f32
    %61 = vector.broadcast %cst_16 : f32 to vector<16x384xf32>
    %62 = arith.cmpf olt, %60, %61 : vector<16x384xf32>
    %63 = arith.andi %56, %62 : vector<16x384xi1>
    %cst_17 = arith.constant 0x7F800000 : f32
    %64 = vector.broadcast %cst_17 : f32 to vector<16x384xf32>
    %65 = arith.select %63, %64, %51 : vector<16x384xi1>, vector<16x384xf32>
    %cst_18 = arith.constant dense<0x7F800000> : vector<384xf32>
    %66 = vector.multi_reduction <minimumf>, %65, %cst_18 [0] : vector<16x384xf32> to vector<384xf32>
    %67 = vector.shape_cast %66 : vector<384xf32> to vector<1x384xf32>
    %68 = arith.addf %54, %67 : vector<1x384xf32>
    %69 = vector.broadcast %67 : vector<1x384xf32> to vector<16x384xf32>
    %70 = arith.cmpf oeq, %65, %69 : vector<16x384xf32>
    %71 = arith.extui %70 : vector<16x384xi1> to vector<16x384xi32>
    %72 = arith.sitofp %71 : vector<16x384xi32> to vector<16x384xf32>
    %73 = arith.truncf %72 : vector<16x384xf32> to vector<16x384xbf16>
    %cst_19 = arith.constant dense<0.000000e+00> : vector<16x384xf32>
    %74 = tpu.matmul %8, %73, %cst_19 {dimension_numbers = #tpu.dot_dimension_numbers<[1], [0], [0], [1], [0, 0, 1, 1], [], []>} : vector<16x16xbf16>, vector<16x384xbf16>, vector<16x384xf32> -> vector<16x384xf32>
    %cst_20 = arith.constant 5.000000e-01 : f32
    %75 = vector.broadcast %cst_20 : f32 to vector<16x384xf32>
    %76 = arith.cmpf olt, %74, %75 : vector<16x384xf32>
    %77 = arith.andi %70, %76 : vector<16x384xi1>
    %cst_21 = arith.constant 0x7F800000 : f32
    %78 = vector.broadcast %cst_21 : f32 to vector<16x384xf32>
    %79 = arith.select %77, %78, %65 : vector<16x384xi1>, vector<16x384xf32>
    %cst_22 = arith.constant dense<0x7F800000> : vector<384xf32>
    %80 = vector.multi_reduction <minimumf>, %79, %cst_22 [0] : vector<16x384xf32> to vector<384xf32>
    %81 = vector.shape_cast %80 : vector<384xf32> to vector<1x384xf32>
    %82 = arith.addf %68, %81 : vector<1x384xf32>
    %c0_23 = arith.constant 0 : index
    %c0_24 = arith.constant 0 : index
    %83 = vector.load %arg2[%c0_23, %c0_24] : memref<1x384xf32, #tpu.memory_space<vmem>>, vector<1x384xf32>
    tpu.vector_store %arg2[%c0_23, %c0_24], %82 {strides = array<i32>} : memref<1x384xf32, #tpu.memory_space<vmem>>, vector<1x384xf32>,
    return
  }
  func.func @transform_0(%arg0: i32) -> (i32, i32) {
    %c0_i32 = arith.constant 0 : i32
    %c0_i32_0 = arith.constant 0 : i32
    return %c0_i32, %arg0 : i32, i32
  }
  func.func @transform_1(%arg0: i32) -> (i32, i32) {
    %c0_i32 = arith.constant 0 : i32
    %c0_i32_0 = arith.constant 0 : i32
    return %c0_i32, %arg0 : i32, i32
  }
}

</mosaic_0001>

<llo_original>
// kernel: tpu_custom_call.1
$region0: #{tpu_custom_call.1}
  #allocation0 [shape = 'u32[]', space=smem, size = 0x4, offset = 0x4, fixed_abs, tag = 'smem constant byte address 0x4 - core index']
  #allocation1 [shape = 'u32[144,128]{1,0:T(1,128)}', space=vmem, size = 0x12000, scoped, tag = 'internal scratch']
  %s0 = inlined_call_operand.hbm [shape: f32[16,384], index: 0, kind: input, shape index: {}]
  %s1 = inlined_call_operand.hbm [shape: f32[1,384], index: 1, kind: output, shape index: {}]
  %s2 = sld [smem:[#allocation0]]
  $region18: #{tpu_custom_call.1} parent=0
    _
  %s4 = ssub.s32 1, %s2
  %s5 = scalar_select 0, %s4, %s2
  $region1: #{tpu_custom_call.1} parent=0
    #allocation2 [shape = 'u8[24576]{0}', space=vmem, size = 0x6000, scoped, tag = 'input window, operand 0, single buffered']
    #allocation3 [shape = 's32[1]{0}', space=sflag, size = 0x4, scoped, tag = 'scoped memory for tpu_custom_call.1']
    #allocation4 [shape = 's32[1]{0}', space=sflag, size = 0x4, scoped, tag = 'scoped memory for tpu_custom_call.1']
    #allocation5 [shape = 'u8[1536]{0}', space=vmem, size = 0x800, scoped, tag = 'output window, operand 0, single buffered']
    %6 = vsyncpa [#allocation3], 0
    %7 = vsyncpa [#allocation4], 0
    // Predicated region
    $region2: #{tpu_custom_call.1} parent=1 // pred_check
      _
    $region3: #{tpu_custom_call.1} parent=1 // pred_check_branch
      %9 = sbr.rel (0) target = $region5
    $region4: #{tpu_custom_call.1} parent=1 // pred_region
      %s11 = ssub.s32 768, 768
      %12 = vsyncadd [#allocation3], %s11
      %s13 = sshll.u32 [#allocation2], 4
      %s14 = int_to_ptr.vmem [resolvable:$true] %s13
      %19 = dma.hbm_to_vmem [thread:$0]  %s0, 768, %s14, [#allocation3], 384, 384, 24
    $region5: #{tpu_custom_call.1} parent=1 // pred_fallthru
      _
    // Predicated region
    $region6: #{tpu_custom_call.1} parent=1 // pred_check
      _
    $region7: #{tpu_custom_call.1} parent=1 // pred_check_branch
      %21 = sbr.rel (0) target = $region9
    $region8: #{tpu_custom_call.1} parent=1 // pred_region
      %22 = dma.done [#allocation3], 768
    $region9: #{tpu_custom_call.1} parent=1 // pred_fallthru
      _
    %v24 = vld [vmem:[#allocation2] sm:$0xff]
    %v25 = vld [vmem:[#allocation2 + $0x8] sm:$0xff]
    %v26 = vld [vmem:[#allocation2 + $0x10] sm:$0xff]
    %v27 = vld [vmem:[#allocation2 + $0x18] sm:$0xff]
    %v28 = vld [vmem:[#allocation2 + $0x20] sm:$0xff]
    %v29 = vld [vmem:[#allocation2 + $0x28] sm:$0xff]
    %v30 = vmax.f32 %v24, 1e-08
    %v31 = vmax.f32 %v25, 1e-08
    %v32 = vmax.f32 %v26, 1e-08
    %v33 = vmax.f32 %v27, 1e-08
    %v34 = vmax.f32 %v28, 1e-08
    %v35 = vmax.f32 %v29, 1e-08
    %v36 = vlaneseq
    %v37 = vshrl.u32 %v36, 7
    %v38 = vadd.s32 %v37, 8
    %v39 = vlaneseq
    %v40 = vand.u32 %v39, 127
    %vm41 = vcmp.gt.s32.totalorder %v37, %v40
    %vm42 = vcmp.gt.s32.totalorder %v38, %v40
    %v43 = vsel %vm41, 1, 0
    %v44 = vsel %vm42, 1, 0
    %v45 = vcvt.s32.f32 %v43
    %v46 = vcvt.s32.f32 %v44
    %v47 = vpack.c.bf16 %v46, %v45
    %v48 = vmin.f32 %v30, %v33
    %v49 = vrot.slane %v48, 4
    %v50 = vmin.f32 %v48, %v49
    %v51 = vrot.slane %v50, 2
    %v52 = vmin.f32 %v50, %v51
    %v53 = vrot.slane %v52, 1
    %v54 = vmin.f32 %v52, %v53
    %v55 = vmin.f32 %v31, %v34
    %v56 = vrot.slane %v55, 4
    %v57 = vmin.f32 %v55, %v56
    %v58 = vrot.slane %v57, 2
    %v59 = vmin.f32 %v57, %v58
    %v60 = vrot.slane %v59, 1
    %v61 = vmin.f32 %v59, %v60
    %v62 = vmin.f32 %v32, %v35
    %v63 = vrot.slane %v62, 4
    %v64 = vmin.f32 %v62, %v63
    %v65 = vrot.slane %v64, 2
    %v66 = vmin.f32 %v64, %v65
    %v67 = vrot.slane %v66, 1
    %v68 = vmin.f32 %v66, %v67
    %v69 = vadd.f32 %v54, 0.0
    %v70 = vadd.f32 %v61, 0.0
    %v71 = vadd.f32 %v68, 0.0
    %vm72 = vcmp.eq.f32.partialorder %v30, %v54
    %vm73 = vcmp.eq.f32.partialorder %v31, %v61
    %vm74 = vcmp.eq.f32.partialorder %v32, %v68
    %vm75 = vcmp.eq.f32.partialorder %v33, %v54
    %vm76 = vcmp.eq.f32.partialorder %v34, %v61
    %vm77 = vcmp.eq.f32.partialorder %v35, %v68
    %v78 = vsel %vm72, 1, 0
    %v79 = vsel %vm73, 1, 0
    %v80 = vsel %vm74, 1, 0
    %v81 = vsel %vm75, 1, 0
    %v82 = vsel %vm76, 1, 0
    %v83 = vsel %vm77, 1, 0
    %v84 = vcvt.s32.f32 %v78
    %v85 = vcvt.s32.f32 %v79
    %v86 = vcvt.s32.f32 %v80
    %v87 = vcvt.s32.f32 %v81
    %v88 = vcvt.s32.f32 %v82
    %v89 = vcvt.s32.f32 %v83
    %v90 = vpack.c.bf16 %v87, %v84
    %v91 = vpack.c.bf16 %v88, %v85
    %v92 = vpack.c.bf16 %v89, %v86
    %vm93 = vcmask 130048
    %v95 = vsel %vm93, %v47, 0
    %97 = vmatprep.subr.bf16.mxu0 %v91
    %98 = vmatpush1.bf16.msra.mxu0 %v90
    %99 = vmatprep.subr.bf16.mxu0 0
    %100 = vmatpush1.bf16.msra.mxu0 0
    %101 = vmatprep.subr.bf16.mxu0 0
    %102 = vmatpush1.bf16.msra.mxu0 0
    %103 = vmatprep.subr.bf16.mxu0 0
    %104 = vmatpush1.bf16.msra.mxu0 0
    %105 = vmatprep.subr.bf16.mxu0 0
    %106 = vmatpush1.bf16.msra.mxu0 0
    %107 = vmatprep.subr.bf16.mxu0 0
    %108 = vmatpush1.bf16.msra.mxu0 0
    %109 = vmatprep.subr.bf16.mxu0 0
    %110 = vmatpush1.bf16.msra.mxu0 0
    %111 = vmatprep.subr.bf16.mxu0 0
    %112 = vmatpush1.bf16.msra.mxu0 0
    %113 = vmatprep.subr.bf16.mxu0 0
    %114 = vmatpush1.bf16.msra.mxu0 0
    %115 = vmatprep.subr.bf16.mxu0 0
    %116 = vmatpush1.bf16.msra.mxu0 0
    %117 = vmatprep.subr.bf16.mxu0 0
    %118 = vmatpush1.bf16.msra.mxu0 0
    %119 = vmatprep.subr.bf16.mxu0 0
    %120 = vmatpush1.bf16.msra.mxu0 0
    %121 = vmatprep.subr.bf16.mxu0 0
    %122 = vmatpush1.bf16.msra.mxu0 0
    %123 = vmatprep.subr.bf16.mxu0 0
    %124 = vmatpush1.bf16.msra.mxu0 0
    %125 = vmatprep.subr.bf16.mxu0 0
    %126 = vmatpush1.bf16.msra.mxu0 0
    %127 = vmatprep.subr.bf16.mxu0 0
    %128 = vmatpush1.bf16.msra.mxu0 0
    %129 = vmatprep.mubr.bf16.mxu0 0
    %130 = vmatmul.mubr.bf16.gmra.mrb[0].mxu0 %v95
    %v131 = vpop.f32.mrb[0].mxu0
    %v132 = vadd.f32 0.0, %v131
    %v133 = vpop.f32.mrb[0].mxu0
    %v134 = vadd.f32 0.0, %v133
    %v135 = vpop.f32.mrb[0].mxu0
    %v136 = vadd.f32 0.0, %v135
    %v137 = vpop.f32.mrb[0].mxu0
    %v138 = vadd.f32 0.0, %v137
    %139 = vdwg.mxu0
    %140 = vmatprep.subr.bf16.mxu0 0
    %141 = vmatpush1.bf16.msra.mxu0 %v92
    %142 = vmatprep.subr.bf16.mxu0 0
    %143 = vmatpush1.bf16.msra.mxu0 0
    %144 = vmatprep.subr.bf16.mxu0 0
    %145 = vmatpush1.bf16.msra.mxu0 0
    %146 = vmatprep.subr.bf16.mxu0 0
    %147 = vmatpush1.bf16.msra.mxu0 0
    %148 = vmatprep.subr.bf16.mxu0 0
    %149 = vmatpush1.bf16.msra.mxu0 0
    %150 = vmatprep.subr.bf16.mxu0 0
    %151 = vmatpush1.bf16.msra.mxu0 0
    %152 = vmatprep.subr.bf16.mxu0 0
    %153 = vmatpush1.bf16.msra.mxu0 0
    %154 = vmatprep.subr.bf16.mxu0 0
    %155 = vmatpush1.bf16.msra.mxu0 0
    %156 = vmatprep.subr.bf16.mxu0 0
    %157 = vmatpush1.bf16.msra.mxu0 0
    %158 = vmatprep.subr.bf16.mxu0 0
    %159 = vmatpush1.bf16.msra.mxu0 0
    %160 = vmatprep.subr.bf16.mxu0 0
    %161 = vmatpush1.bf16.msra.mxu0 0
    %162 = vmatprep.subr.bf16.mxu0 0
    %163 = vmatpush1.bf16.msra.mxu0 0
    %164 = vmatprep.subr.bf16.mxu0 0
    %165 = vmatpush1.bf16.msra.mxu0 0
    %166 = vmatprep.subr.bf16.mxu0 0
    %167 = vmatpush1.bf16.msra.mxu0 0
    %168 = vmatprep.subr.bf16.mxu0 0
    %169 = vmatpush1.bf16.msra.mxu0 0
    %170 = vmatprep.subr.bf16.mxu0 0
    %171 = vmatpush1.bf16.msra.mxu0 0
    %172 = vmatprep.mubr.bf16.mxu0 0
    %173 = vmatmul.mubr.bf16.gmra.mrb[0].mxu0 %v95
    %v174 = vpop.f32.mrb[0].mxu0
    %v175 = vadd.f32 0.0, %v174
    %v176 = vpop.f32.mrb[0].mxu0
    %v177 = vpop.f32.mrb[0].mxu0
    %v178 = vadd.f32 0.0, %v177
    %v179 = vpop.f32.mrb[0].mxu0
    %180 = vdwg.mxu0
    %vm181 = vcmp.lt.f32.partialorder %v132, 0.5
    %vm182 = vcmp.lt.f32.partialorder %v134, 0.5
    %vm183 = vcmp.lt.f32.partialorder %v175, 0.5
    %vm184 = vcmp.lt.f32.partialorder %v136, 0.5
    %vm185 = vcmp.lt.f32.partialorder %v138, 0.5
    %vm186 = vcmp.lt.f32.partialorder %v178, 0.5
    %vm187 = vmand %vm72, %vm181
    %vm188 = vmand %vm73, %vm182
    %vm189 = vmand %vm74, %vm183
    %vm190 = vmand %vm75, %vm184
    %vm191 = vmand %vm76, %vm185
    %vm192 = vmand %vm77, %vm186
    %v193 = vsel %vm187, inf, %v30
    %v194 = vsel %vm188, inf, %v31
    %v195 = vsel %vm189, inf, %v32
    %v196 = vsel %vm190, inf, %v33
    %v197 = vsel %vm191, inf, %v34
    %v198 = vsel %vm192, inf, %v35
    %v199 = vmin.f32 %v193, %v196
    %v200 = vrot.slane %v199, 4
    %v201 = vmin.f32 %v199, %v200
    %v202 = vrot.slane %v201, 2
    %v203 = vmin.f32 %v201, %v202
    %v204 = vrot.slane %v203, 1
    %v205 = vmin.f32 %v203, %v204
    %v206 = vmin.f32 %v194, %v197
    %v207 = vrot.slane %v206, 4
    %v208 = vmin.f32 %v206, %v207
    %v209 = vrot.slane %v208, 2
    %v210 = vmin.f32 %v208, %v209
    %v211 = vrot.slane %v210, 1
    %v212 = vmin.f32 %v210, %v211
    %v213 = vmin.f32 %v195, %v198
    %v214 = vrot.slane %v213, 4
    %v215 = vmin.f32 %v213, %v214
    %v216 = vrot.slane %v215, 2
    %v217 = vmin.f32 %v215, %v216
    %v218 = vrot.slane %v217, 1
    %v219 = vmin.f32 %v217, %v218
    %v220 = vadd.f32 %v69, %v205
    %v221 = vadd.f32 %v70, %v212
    %v222 = vadd.f32 %v71, %v219
    %vm223 = vcmp.eq.f32.partialorder %v193, %v205
    %vm224 = vcmp.eq.f32.partialorder %v194, %v212
    %vm225 = vcmp.eq.f32.partialorder %v195, %v219
    %vm226 = vcmp.eq.f32.partialorder %v196, %v205
    %vm227 = vcmp.eq.f32.partialorder %v197, %v212
    %vm228 = vcmp.eq.f32.partialorder %v198, %v219
    %v229 = vsel %vm223, 1, 0
    %v230 = vsel %vm224, 1, 0
    %v231 = vsel %vm225, 1, 0
    %v232 = vsel %vm226, 1, 0
    %v233 = vsel %vm227, 1, 0
    %v234 = vsel %vm228, 1, 0
    %v235 = vcvt.s32.f32 %v229
    %v236 = vcvt.s32.f32 %v230
    %v237 = vcvt.s32.f32 %v231
    %v238 = vcvt.s32.f32 %v232
    %v239 = vcvt.s32.f32 %v233
    %v240 = vcvt.s32.f32 %v234
    %v241 = vpack.c.bf16 %v238, %v235
    %v242 = vpack.c.bf16 %v239, %v236
    %v243 = vpack.c.bf16 %v240, %v237
    %244 = vmatprep.subr.bf16.mxu0 %v242
    %245 = vmatpush1.bf16.msra.mxu0 %v241
    %246 = vmatprep.subr.bf16.mxu0 0
    %247 = vmatpush1.bf16.msra.mxu0 0
    %248 = vmatprep.subr.bf16.mxu0 0
    %249 = vmatpush1.bf16.msra.mxu0 0
    %250 = vmatprep.subr.bf16.mxu0 0
    %251 = vmatpush1.bf16.msra.mxu0 0
    %252 = vmatprep.subr.bf16.mxu0 0
    %253 = vmatpush1.bf16.msra.mxu0 0
    %254 = vmatprep.subr.bf16.mxu0 0
    %255 = vmatpush1.bf16.msra.mxu0 0
    %256 = vmatprep.subr.bf16.mxu0 0
    %257 = vmatpush1.bf16.msra.mxu0 0
    %258 = vmatprep.subr.bf16.mxu0 0
    %259 = vmatpush1.bf16.msra.mxu0 0
    %260 = vmatprep.subr.bf16.mxu0 0
    %261 = vmatpush1.bf16.msra.mxu0 0
    %262 = vmatprep.subr.bf16.mxu0 0
    %263 = vmatpush1.bf16.msra.mxu0 0
    %264 = vmatprep.subr.bf16.mxu0 0
    %265 = vmatpush1.bf16.msra.mxu0 0
    %266 = vmatprep.subr.bf16.mxu0 0
    %267 = vmatpush1.bf16.msra.mxu0 0
    %268 = vmatprep.subr.bf16.mxu0 0
    %269 = vmatpush1.bf16.msra.mxu0 0
    %270 = vmatprep.subr.bf16.mxu0 0
    %271 = vmatpush1.bf16.msra.mxu0 0
    %272 = vmatprep.subr.bf16.mxu0 0
    %273 = vmatpush1.bf16.msra.mxu0 0
    %274 = vmatprep.subr.bf16.mxu0 0
    %275 = vmatpush1.bf16.msra.mxu0 0
    %276 = vmatprep.mubr.bf16.mxu0 0
    %277 = vmatmul.mubr.bf16.gmra.mrb[0].mxu0 %v95
    %v278 = vpop.f32.mrb[0].mxu0
    %v279 = vadd.f32 0.0, %v278
    %v280 = vpop.f32.mrb[0].mxu0
    %v281 = vadd.f32 0.0, %v280
    %v282 = vpop.f32.mrb[0].mxu0
    %v283 = vadd.f32 0.0, %v282
    %v284 = vpop.f32.mrb[0].mxu0
    %v285 = vadd.f32 0.0, %v284
    %286 = vdwg.mxu0
    %287 = vmatprep.subr.bf16.mxu0 0
    %288 = vmatpush1.bf16.msra.mxu0 %v243
    %289 = vmatprep.subr.bf16.mxu0 0
    %290 = vmatpush1.bf16.msra.mxu0 0
    %291 = vmatprep.subr.bf16.mxu0 0
    %292 = vmatpush1.bf16.msra.mxu0 0
    %293 = vmatprep.subr.bf16.mxu0 0
    %294 = vmatpush1.bf16.msra.mxu0 0
    %295 = vmatprep.subr.bf16.mxu0 0
    %296 = vmatpush1.bf16.msra.mxu0 0
    %297 = vmatprep.subr.bf16.mxu0 0
    %298 = vmatpush1.bf16.msra.mxu0 0
    %299 = vmatprep.subr.bf16.mxu0 0
    %300 = vmatpush1.bf16.msra.mxu0 0
    %301 = vmatprep.subr.bf16.mxu0 0
    %302 = vmatpush1.bf16.msra.mxu0 0
    %303 = vmatprep.subr.bf16.mxu0 0
    %304 = vmatpush1.bf16.msra.mxu0 0
    %305 = vmatprep.subr.bf16.mxu0 0
    %306 = vmatpush1.bf16.msra.mxu0 0
    %307 = vmatprep.subr.bf16.mxu0 0
    %308 = vmatpush1.bf16.msra.mxu0 0
    %309 = vmatprep.subr.bf16.mxu0 0
    %310 = vmatpush1.bf16.msra.mxu0 0
    %311 = vmatprep.subr.bf16.mxu0 0
    %312 = vmatpush1.bf16.msra.mxu0 0
    %313 = vmatprep.subr.bf16.mxu0 0
    %314 = vmatpush1.bf16.msra.mxu0 0
    %315 = vmatprep.subr.bf16.mxu0 0
    %316 = vmatpush1.bf16.msra.mxu0 0
    %317 = vmatprep.subr.bf16.mxu0 0
    %318 = vmatpush1.bf16.msra.mxu0 0
    %319 = vmatprep.mubr.bf16.mxu0 0
    %320 = vmatmul.mubr.bf16.gmra.mrb[0].mxu0 %v95
    %v321 = vpop.f32.mrb[0].mxu0
    %v322 = vadd.f32 0.0, %v321
    %v323 = vpop.f32.mrb[0].mxu0
    %v324 = vpop.f32.mrb[0].mxu0
    %v325 = vadd.f32 0.0, %v324
    %v326 = vpop.f32.mrb[0].mxu0
    %327 = vdwg.mxu0
    %vm328 = vcmp.lt.f32.partialorder %v279, 0.5
    %vm329 = vcmp.lt.f32.partialorder %v281, 0.5
    %vm330 = vcmp.lt.f32.partialorder %v322, 0.5
    %vm331 = vcmp.lt.f32.partialorder %v283, 0.5
    %vm332 = vcmp.lt.f32.partialorder %v285, 0.5
    %vm333 = vcmp.lt.f32.partialorder %v325, 0.5
    %vm334 = vmand %vm223, %vm328
    %vm335 = vmand %vm224, %vm329
    %vm336 = vmand %vm225, %vm330
    %vm337 = vmand %vm226, %vm331
    %vm338 = vmand %vm227, %vm332
    %vm339 = vmand %vm228, %vm333
    %v340 = vsel %vm334, inf, %v193
    %v341 = vsel %vm335, inf, %v194
    %v342 = vsel %vm336, inf, %v195
    %v343 = vsel %vm337, inf, %v196
    %v344 = vsel %vm338, inf, %v197
    %v345 = vsel %vm339, inf, %v198
    %v346 = vmin.f32 %v340, %v343
    %v347 = vrot.slane %v346, 4
    %v348 = vmin.f32 %v346, %v347
    %v349 = vrot.slane %v348, 2
    %v350 = vmin.f32 %v348, %v349
    %v351 = vrot.slane %v350, 1
    %v352 = vmin.f32 %v350, %v351
    %v353 = vmin.f32 %v341, %v344
    %v354 = vrot.slane %v353, 4
    %v355 = vmin.f32 %v353, %v354
    %v356 = vrot.slane %v355, 2
    %v357 = vmin.f32 %v355, %v356
    %v358 = vrot.slane %v357, 1
    %v359 = vmin.f32 %v357, %v358
    %v360 = vmin.f32 %v342, %v345
    %v361 = vrot.slane %v360, 4
    %v362 = vmin.f32 %v360, %v361
    %v363 = vrot.slane %v362, 2
    %v364 = vmin.f32 %v362, %v363
    %v365 = vrot.slane %v364, 1
    %v366 = vmin.f32 %v364, %v365
    %v367 = vadd.f32 %v220, %v352
    %v368 = vadd.f32 %v221, %v359
    %v369 = vadd.f32 %v222, %v366
    %vm370 = vcmp.eq.f32.partialorder %v340, %v352
    %vm371 = vcmp.eq.f32.partialorder %v341, %v359
    %vm372 = vcmp.eq.f32.partialorder %v342, %v366
    %vm373 = vcmp.eq.f32.partialorder %v343, %v352
    %vm374 = vcmp.eq.f32.partialorder %v344, %v359
    %vm375 = vcmp.eq.f32.partialorder %v345, %v366
    %v376 = vsel %vm370, 1, 0
    %v377 = vsel %vm371, 1, 0
    %v378 = vsel %vm372, 1, 0
    %v379 = vsel %vm373, 1, 0
    %v380 = vsel %vm374, 1, 0
    %v381 = vsel %vm375, 1, 0
    %v382 = vcvt.s32.f32 %v376
    %v383 = vcvt.s32.f32 %v377
    %v384 = vcvt.s32.f32 %v378
    %v385 = vcvt.s32.f32 %v379
    %v386 = vcvt.s32.f32 %v380
    %v387 = vcvt.s32.f32 %v381
    %v388 = vpack.c.bf16 %v385, %v382
    %v389 = vpack.c.bf16 %v386, %v383
    %v390 = vpack.c.bf16 %v387, %v384
    %391 = vmatprep.subr.bf16.mxu0 %v389
    %392 = vmatpush1.bf16.msra.mxu0 %v388
    %393 = vmatprep.subr.bf16.mxu0 0
    %394 = vmatpush1.bf16.msra.mxu0 0
    %395 = vmatprep.subr.bf16.mxu0 0
    %396 = vmatpush1.bf16.msra.mxu0 0
    %397 = vmatprep.subr.bf16.mxu0 0
    %398 = vmatpush1.bf16.msra.mxu0 0
    %399 = vmatprep.subr.bf16.mxu0 0
    %400 = vmatpush1.bf16.msra.mxu0 0
    %401 = vmatprep.subr.bf16.mxu0 0
    %402 = vmatpush1.bf16.msra.mxu0 0
    %403 = vmatprep.subr.bf16.mxu0 0
    %404 = vmatpush1.bf16.msra.mxu0 0
    %405 = vmatprep.subr.bf16.mxu0 0
    %406 = vmatpush1.bf16.msra.mxu0 0
    %407 = vmatprep.subr.bf16.mxu0 0
    %408 = vmatpush1.bf16.msra.mxu0 0
    %409 = vmatprep.subr.bf16.mxu0 0
    %410 = vmatpush1.bf16.msra.mxu0 0
    %411 = vmatprep.subr.bf16.mxu0 0
    %412 = vmatpush1.bf16.msra.mxu0 0
    %413 = vmatprep.subr.bf16.mxu0 0
    %414 = vmatpush1.bf16.msra.mxu0 0
    %415 = vmatprep.subr.bf16.mxu0 0
    %416 = vmatpush1.bf16.msra.mxu0 0
    %417 = vmatprep.subr.bf16.mxu0 0
    %418 = vmatpush1.bf16.msra.mxu0 0
    %419 = vmatprep.subr.bf16.mxu0 0
    %420 = vmatpush1.bf16.msra.mxu0 0
    %421 = vmatprep.subr.bf16.mxu0 0
    %422 = vmatpush1.bf16.msra.mxu0 0
    %423 = vmatprep.mubr.bf16.mxu0 0
    %424 = vmatmul.mubr.bf16.gmra.mrb[0].mxu0 %v95
    %v425 = vpop.f32.mrb[0].mxu0
    %v426 = vadd.f32 0.0, %v425
    %v427 = vpop.f32.mrb[0].mxu0
    %v428 = vadd.f32 0.0, %v427
    %v429 = vpop.f32.mrb[0].mxu0
    %v430 = vadd.f32 0.0, %v429
    %v431 = vpop.f32.mrb[0].mxu0
    %v432 = vadd.f32 0.0, %v431
    %433 = vdwg.mxu0
    %434 = vmatprep.subr.bf16.mxu0 0
    %435 = vmatpush1.bf16.msra.mxu0 %v390
    %436 = vmatprep.subr.bf16.mxu0 0
    %437 = vmatpush1.bf16.msra.mxu0 0
    %438 = vmatprep.subr.bf16.mxu0 0
    %439 = vmatpush1.bf16.msra.mxu0 0
    %440 = vmatprep.subr.bf16.mxu0 0
    %441 = vmatpush1.bf16.msra.mxu0 0
    %442 = vmatprep.subr.bf16.mxu0 0
    %443 = vmatpush1.bf16.msra.mxu0 0
    %444 = vmatprep.subr.bf16.mxu0 0
    %445 = vmatpush1.bf16.msra.mxu0 0
    %446 = vmatprep.subr.bf16.mxu0 0
    %447 = vmatpush1.bf16.msra.mxu0 0
    %448 = vmatprep.subr.bf16.mxu0 0
    %449 = vmatpush1.bf16.msra.mxu0 0
    %450 = vmatprep.subr.bf16.mxu0 0
    %451 = vmatpush1.bf16.msra.mxu0 0
    %452 = vmatprep.subr.bf16.mxu0 0
    %453 = vmatpush1.bf16.msra.mxu0 0
    %454 = vmatprep.subr.bf16.mxu0 0
    %455 = vmatpush1.bf16.msra.mxu0 0
    %456 = vmatprep.subr.bf16.mxu0 0
    %457 = vmatpush1.bf16.msra.mxu0 0
    %458 = vmatprep.subr.bf16.mxu0 0
    %459 = vmatpush1.bf16.msra.mxu0 0
    %460 = vmatprep.subr.bf16.mxu0 0
    %461 = vmatpush1.bf16.msra.mxu0 0
    %462 = vmatprep.subr.bf16.mxu0 0
    %463 = vmatpush1.bf16.msra.mxu0 0
    %464 = vmatprep.subr.bf16.mxu0 0
    %465 = vmatpush1.bf16.msra.mxu0 0
    %466 = vmatprep.mubr.bf16.mxu0 0
    %467 = vmatmul.mubr.bf16.gmra.mrb[0].mxu0 %v95
    %v468 = vpop.f32.mrb[0].mxu0
    %v469 = vadd.f32 0.0, %v468
    %v470 = vpop.f32.mrb[0].mxu0
    %v471 = vpop.f32.mrb[0].mxu0
    %v472 = vadd.f32 0.0, %v471
    %v473 = vpop.f32.mrb[0].mxu0
    %474 = vdwg.mxu0
    %vm475 = vcmp.lt.f32.partialorder %v426, 0.5
    %vm476 = vcmp.lt.f32.partialorder %v428, 0.5
    %vm477 = vcmp.lt.f32.partialorder %v469, 0.5
    %vm478 = vcmp.lt.f32.partialorder %v430, 0.5
    %vm479 = vcmp.lt.f32.partialorder %v432, 0.5
    %vm480 = vcmp.lt.f32.partialorder %v472, 0.5
    %vm481 = vmand %vm370, %vm475
    %vm482 = vmand %vm371, %vm476
    %vm483 = vmand %vm372, %vm477
    %vm484 = vmand %vm373, %vm478
    %vm485 = vmand %vm374, %vm479
    %vm486 = vmand %vm375, %vm480
    %v487 = vsel %vm481, inf, %v340
    %v488 = vsel %vm482, inf, %v341
    %v489 = vsel %vm483, inf, %v342
    %v490 = vsel %vm484, inf, %v343
    %v491 = vsel %vm485, inf, %v344
    %v492 = vsel %vm486, inf, %v345
    %v493 = vmin.f32 %v487, %v490
    %v494 = vrot.slane %v493, 4
    %v495 = vmin.f32 %v493, %v494
    %v496 = vrot.slane %v495, 2
    %v497 = vmin.f32 %v495, %v496
    %v498 = vrot.slane %v497, 1
    %v499 = vmin.f32 %v497, %v498
    %v500 = vmin.f32 %v488, %v491
    %v501 = vrot.slane %v500, 4
    %v502 = vmin.f32 %v500, %v501
    %v503 = vrot.slane %v502, 2
    %v504 = vmin.f32 %v502, %v503
    %v505 = vrot.slane %v504, 1
    %v506 = vmin.f32 %v504, %v505
    %v507 = vmin.f32 %v489, %v492
    %v508 = vrot.slane %v507, 4
    %v509 = vmin.f32 %v507, %v508
    %v510 = vrot.slane %v509, 2
    %v511 = vmin.f32 %v509, %v510
    %v512 = vrot.slane %v511, 1
    %v513 = vmin.f32 %v511, %v512
    %v514 = vadd.f32 %v367, %v499
    %v515 = vadd.f32 %v368, %v506
    %v516 = vadd.f32 %v369, %v513
    %vm517 = vcmp.eq.f32.partialorder %v487, %v499
    %vm518 = vcmp.eq.f32.partialorder %v488, %v506
    %vm519 = vcmp.eq.f32.partialorder %v489, %v513
    %vm520 = vcmp.eq.f32.partialorder %v490, %v499
    %vm521 = vcmp.eq.f32.partialorder %v491, %v506
    %vm522 = vcmp.eq.f32.partialorder %v492, %v513
    %v523 = vsel %vm517, 1, 0
    %v524 = vsel %vm518, 1, 0
    %v525 = vsel %vm519, 1, 0
    %v526 = vsel %vm520, 1, 0
    %v527 = vsel %vm521, 1, 0
    %v528 = vsel %vm522, 1, 0
    %v529 = vcvt.s32.f32 %v523
    %v530 = vcvt.s32.f32 %v524
    %v531 = vcvt.s32.f32 %v525
    %v532 = vcvt.s32.f32 %v526
    %v533 = vcvt.s32.f32 %v527
    %v534 = vcvt.s32.f32 %v528
    %v535 = vpack.c.bf16 %v532, %v529
    %v536 = vpack.c.bf16 %v533, %v530
    %v537 = vpack.c.bf16 %v534, %v531
    %538 = vmatprep.subr.bf16.mxu0 %v536
    %539 = vmatpush1.bf16.msra.mxu0 %v535
    %540 = vmatprep.subr.bf16.mxu0 0
    %541 = vmatpush1.bf16.msra.mxu0 0
    %542 = vmatprep.subr.bf16.mxu0 0
    %543 = vmatpush1.bf16.msra.mxu0 0
    %544 = vmatprep.subr.bf16.mxu0 0
    %545 = vmatpush1.bf16.msra.mxu0 0
    %546 = vmatprep.subr.bf16.mxu0 0
    %547 = vmatpush1.bf16.msra.mxu0 0
    %548 = vmatprep.subr.bf16.mxu0 0
    %549 = vmatpush1.bf16.msra.mxu0 0
    %550 = vmatprep.subr.bf16.mxu0 0
    %551 = vmatpush1.bf16.msra.mxu0 0
    %552 = vmatprep.subr.bf16.mxu0 0
    %553 = vmatpush1.bf16.msra.mxu0 0
    %554 = vmatprep.subr.bf16.mxu0 0
    %555 = vmatpush1.bf16.msra.mxu0 0
    %556 = vmatprep.subr.bf16.mxu0 0
    %557 = vmatpush1.bf16.msra.mxu0 0
    %558 = vmatprep.subr.bf16.mxu0 0
    %559 = vmatpush1.bf16.msra.mxu0 0
    %560 = vmatprep.subr.bf16.mxu0 0
    %561 = vmatpush1.bf16.msra.mxu0 0
    %562 = vmatprep.subr.bf16.mxu0 0
    %563 = vmatpush1.bf16.msra.mxu0 0
    %564 = vmatprep.subr.bf16.mxu0 0
    %565 = vmatpush1.bf16.msra.mxu0 0
    %566 = vmatprep.subr.bf16.mxu0 0
    %567 = vmatpush1.bf16.msra.mxu0 0
    %568 = vmatprep.subr.bf16.mxu0 0
    %569 = vmatpush1.bf16.msra.mxu0 0
    %570 = vmatprep.mubr.bf16.mxu0 0
    %571 = vmatmul.mubr.bf16.gmra.mrb[0].mxu0 %v95
    %v572 = vpop.f32.mrb[0].mxu0
    %v573 = vadd.f32 0.0, %v572
    %v574 = vpop.f32.mrb[0].mxu0
    %v575 = vadd.f32 0.0, %v574
    %v576 = vpop.f32.mrb[0].mxu0
    %v577 = vadd.f32 0.0, %v576
    %v578 = vpop.f32.mrb[0].mxu0
    %v579 = vadd.f32 0.0, %v578
    %580 = vdwg.mxu0
    %581 = vmatprep.subr.bf16.mxu0 0
    %582 = vmatpush1.bf16.msra.mxu0 %v537
    %583 = vmatprep.subr.bf16.mxu0 0
    %584 = vmatpush1.bf16.msra.mxu0 0
    %585 = vmatprep.subr.bf16.mxu0 0
    %586 = vmatpush1.bf16.msra.mxu0 0
    %587 = vmatprep.subr.bf16.mxu0 0
    %588 = vmatpush1.bf16.msra.mxu0 0
    %589 = vmatprep.subr.bf16.mxu0 0
    %590 = vmatpush1.bf16.msra.mxu0 0
    %591 = vmatprep.subr.bf16.mxu0 0
    %592 = vmatpush1.bf16.msra.mxu0 0
    %593 = vmatprep.subr.bf16.mxu0 0
    %594 = vmatpush1.bf16.msra.mxu0 0
    %595 = vmatprep.subr.bf16.mxu0 0
    %596 = vmatpush1.bf16.msra.mxu0 0
    %597 = vmatprep.subr.bf16.mxu0 0
    %598 = vmatpush1.bf16.msra.mxu0 0
    %599 = vmatprep.subr.bf16.mxu0 0
    %600 = vmatpush1.bf16.msra.mxu0 0
    %601 = vmatprep.subr.bf16.mxu0 0
    %602 = vmatpush1.bf16.msra.mxu0 0
    %603 = vmatprep.subr.bf16.mxu0 0
    %604 = vmatpush1.bf16.msra.mxu0 0
    %605 = vmatprep.subr.bf16.mxu0 0
    %606 = vmatpush1.bf16.msra.mxu0 0
    %607 = vmatprep.subr.bf16.mxu0 0
    %608 = vmatpush1.bf16.msra.mxu0 0
    %609 = vmatprep.subr.bf16.mxu0 0
    %610 = vmatpush1.bf16.msra.mxu0 0
    %611 = vmatprep.subr.bf16.mxu0 0
    %612 = vmatpush1.bf16.msra.mxu0 0
    %613 = vmatprep.mubr.bf16.mxu0 0
    %614 = vmatmul.mubr.bf16.gmra.mrb[0].mxu0 %v95
    %v615 = vpop.f32.mrb[0].mxu0
    %v616 = vadd.f32 0.0, %v615
    %v617 = vpop.f32.mrb[0].mxu0
    %v618 = vpop.f32.mrb[0].mxu0
    %v619 = vadd.f32 0.0, %v618
    %v620 = vpop.f32.mrb[0].mxu0
    %621 = vdwg.mxu0
    %vm622 = vcmp.lt.f32.partialorder %v573, 0.5
    %vm623 = vcmp.lt.f32.partialorder %v575, 0.5
    %vm624 = vcmp.lt.f32.partialorder %v616, 0.5
    %vm625 = vcmp.lt.f32.partialorder %v577, 0.5
    %vm626 = vcmp.lt.f32.partialorder %v579, 0.5
    %vm627 = vcmp.lt.f32.partialorder %v619, 0.5
    %vm628 = vmand %vm517, %vm622
    %vm629 = vmand %vm518, %vm623
    %vm630 = vmand %vm519, %vm624
    %vm631 = vmand %vm520, %vm625
    %vm632 = vmand %vm521, %vm626
    %vm633 = vmand %vm522, %vm627
    %v634 = vsel %vm628, inf, %v487
    %v635 = vsel %vm629, inf, %v488
    %v636 = vsel %vm630, inf, %v489
    %v637 = vsel %vm631, inf, %v490
    %v638 = vsel %vm632, inf, %v491
    %v639 = vsel %vm633, inf, %v492
    %v640 = vmin.f32 %v634, %v637
    %v641 = vrot.slane %v640, 4
    %v642 = vmin.f32 %v640, %v641
    %v643 = vrot.slane %v642, 2
    %v644 = vmin.f32 %v642, %v643
    %v645 = vrot.slane %v644, 1
    %v646 = vmin.f32 %v644, %v645
    %v647 = vmin.f32 %v635, %v638
    %v648 = vrot.slane %v647, 4
    %v649 = vmin.f32 %v647, %v648
    %v650 = vrot.slane %v649, 2
    %v651 = vmin.f32 %v649, %v650
    %v652 = vrot.slane %v651, 1
    %v653 = vmin.f32 %v651, %v652
    %v654 = vmin.f32 %v636, %v639
    %v655 = vrot.slane %v654, 4
    %v656 = vmin.f32 %v654, %v655
    %v657 = vrot.slane %v656, 2
    %v658 = vmin.f32 %v656, %v657
    %v659 = vrot.slane %v658, 1
    %v660 = vmin.f32 %v658, %v659
    %v661 = vadd.f32 %v514, %v646
    %v662 = vadd.f32 %v515, %v653
    %v663 = vadd.f32 %v516, %v660
    %vm664 = vcmp.eq.f32.partialorder %v634, %v646
    %vm665 = vcmp.eq.f32.partialorder %v635, %v653
    %vm666 = vcmp.eq.f32.partialorder %v636, %v660
    %vm667 = vcmp.eq.f32.partialorder %v637, %v646
    %vm668 = vcmp.eq.f32.partialorder %v638, %v653
    %vm669 = vcmp.eq.f32.partialorder %v639, %v660
    %v670 = vsel %vm664, 1, 0
    %v671 = vsel %vm665, 1, 0
    %v672 = vsel %vm666, 1, 0
    %v673 = vsel %vm667, 1, 0
    %v674 = vsel %vm668, 1, 0
    %v675 = vsel %vm669, 1, 0
    %v676 = vcvt.s32.f32 %v670
    %v677 = vcvt.s32.f32 %v671
    %v678 = vcvt.s32.f32 %v672
    %v679 = vcvt.s32.f32 %v673
    %v680 = vcvt.s32.f32 %v674
    %v681 = vcvt.s32.f32 %v675
    %v682 = vpack.c.bf16 %v679, %v676
    %v683 = vpack.c.bf16 %v680, %v677
    %v684 = vpack.c.bf16 %v681, %v678
    %685 = vmatprep.subr.bf16.mxu0 %v683
    %686 = vmatpush1.bf16.msra.mxu0 %v682
    %687 = vmatprep.subr.bf16.mxu0 0
    %688 = vmatpush1.bf16.msra.mxu0 0
    %689 = vmatprep.subr.bf16.mxu0 0
    %690 = vmatpush1.bf16.msra.mxu0 0
    %691 = vmatprep.subr.bf16.mxu0 0
    %692 = vmatpush1.bf16.msra.mxu0 0
    %693 = vmatprep.subr.bf16.mxu0 0
    %694 = vmatpush1.bf16.msra.mxu0 0
    %695 = vmatprep.subr.bf16.mxu0 0
    %696 = vmatpush1.bf16.msra.mxu0 0
    %697 = vmatprep.subr.bf16.mxu0 0
    %698 = vmatpush1.bf16.msra.mxu0 0
    %699 = vmatprep.subr.bf16.mxu0 0
    %700 = vmatpush1.bf16.msra.mxu0 0
    %701 = vmatprep.subr.bf16.mxu0 0
    %702 = vmatpush1.bf16.msra.mxu0 0
    %703 = vmatprep.subr.bf16.mxu0 0
    %704 = vmatpush1.bf16.msra.mxu0 0
    %705 = vmatprep.subr.bf16.mxu0 0
    %706 = vmatpush1.bf16.msra.mxu0 0
    %707 = vmatprep.subr.bf16.mxu0 0
    %708 = vmatpush1.bf16.msra.mxu0 0
    %709 = vmatprep.subr.bf16.mxu0 0
    %710 = vmatpush1.bf16.msra.mxu0 0
    %711 = vmatprep.subr.bf16.mxu0 0
    %712 = vmatpush1.bf16.msra.mxu0 0
    %713 = vmatprep.subr.bf16.mxu0 0
    %714 = vmatpush1.bf16.msra.mxu0 0
    %715 = vmatprep.subr.bf16.mxu0 0
    %716 = vmatpush1.bf16.msra.mxu0 0
    %717 = vmatprep.mubr.bf16.mxu0 0
    %718 = vmatmul.mubr.bf16.gmra.mrb[0].mxu0 %v95
    %v719 = vpop.f32.mrb[0].mxu0
    %v720 = vadd.f32 0.0, %v719
    %v721 = vpop.f32.mrb[0].mxu0
    %v722 = vadd.f32 0.0, %v721
    %v723 = vpop.f32.mrb[0].mxu0
    %v724 = vadd.f32 0.0, %v723
    %v725 = vpop.f32.mrb[0].mxu0
    %v726 = vadd.f32 0.0, %v725
    %727 = vdwg.mxu0
    %728 = vmatprep.subr.bf16.mxu0 0
    %729 = vmatpush1.bf16.msra.mxu0 %v684
    %730 = vmatprep.subr.bf16.mxu0 0
    %731 = vmatpush1.bf16.msra.mxu0 0
    %732 = vmatprep.subr.bf16.mxu0 0
    %733 = vmatpush1.bf16.msra.mxu0 0
    %734 = vmatprep.subr.bf16.mxu0 0
    %735 = vmatpush1.bf16.msra.mxu0 0
    %736 = vmatprep.subr.bf16.mxu0 0
    %737 = vmatpush1.bf16.msra.mxu0 0
    %738 = vmatprep.subr.bf16.mxu0 0
    %739 = vmatpush1.bf16.msra.mxu0 0
    %740 = vmatprep.subr.bf16.mxu0 0
    %741 = vmatpush1.bf16.msra.mxu0 0
    %742 = vmatprep.subr.bf16.mxu0 0
    %743 = vmatpush1.bf16.msra.mxu0 0
    %744 = vmatprep.subr.bf16.mxu0 0
    %745 = vmatpush1.bf16.msra.mxu0 0
    %746 = vmatprep.subr.bf16.mxu0 0
    %747 = vmatpush1.bf16.msra.mxu0 0
    %748 = vmatprep.subr.bf16.mxu0 0
    %749 = vmatpush1.bf16.msra.mxu0 0
    %750 = vmatprep.subr.bf16.mxu0 0
    %751 = vmatpush1.bf16.msra.mxu0 0
    %752 = vmatprep.subr.bf16.mxu0 0
    %753 = vmatpush1.bf16.msra.mxu0 0
    %754 = vmatprep.subr.bf16.mxu0 0
    %755 = vmatpush1.bf16.msra.mxu0 0
    %756 = vmatprep.subr.bf16.mxu0 0
    %757 = vmatpush1.bf16.msra.mxu0 0
    %758 = vmatprep.subr.bf16.mxu0 0
    %759 = vmatpush1.bf16.msra.mxu0 0
    %760 = vmatprep.mubr.bf16.mxu0 0
    %761 = vmatmul.mubr.bf16.gmra.mrb[0].mxu0 %v95
    %v762 = vpop.f32.mrb[0].mxu0
    %v763 = vadd.f32 0.0, %v762
    %v764 = vpop.f32.mrb[0].mxu0
    %v765 = vpop.f32.mrb[0].mxu0
    %v766 = vadd.f32 0.0, %v765
    %v767 = vpop.f32.mrb[0].mxu0
    %768 = vdwg.mxu0
    %vm769 = vcmp.lt.f32.partialorder %v720, 0.5
    %vm770 = vcmp.lt.f32.partialorder %v722, 0.5
    %vm771 = vcmp.lt.f32.partialorder %v763, 0.5
    %vm772 = vcmp.lt.f32.partialorder %v724, 0.5
    %vm773 = vcmp.lt.f32.partialorder %v726, 0.5
    %vm774 = vcmp.lt.f32.partialorder %v766, 0.5
    %vm775 = vmand %vm664, %vm769
    %vm776 = vmand %vm665, %vm770
    %vm777 = vmand %vm666, %vm771
    %vm778 = vmand %vm667, %vm772
    %vm779 = vmand %vm668, %vm773
    %vm780 = vmand %vm669, %vm774
    %v781 = vsel %vm775, inf, %v634
    %v782 = vsel %vm776, inf, %v635
    %v783 = vsel %vm777, inf, %v636
    %v784 = vsel %vm778, inf, %v637
    %v785 = vsel %vm779, inf, %v638
    %v786 = vsel %vm780, inf, %v639
    %v787 = vmin.f32 %v781, %v784
    %v788 = vrot.slane %v787, 4
    %v789 = vmin.f32 %v787, %v788
    %v790 = vrot.slane %v789, 2
    %v791 = vmin.f32 %v789, %v790
    %v792 = vrot.slane %v791, 1
    %v793 = vmin.f32 %v791, %v792
    %v794 = vmin.f32 %v782, %v785
    %v795 = vrot.slane %v794, 4
    %v796 = vmin.f32 %v794, %v795
    %v797 = vrot.slane %v796, 2
    %v798 = vmin.f32 %v796, %v797
    %v799 = vrot.slane %v798, 1
    %v800 = vmin.f32 %v798, %v799
    %v801 = vmin.f32 %v783, %v786
    %v802 = vrot.slane %v801, 4
    %v803 = vmin.f32 %v801, %v802
    %v804 = vrot.slane %v803, 2
    %v805 = vmin.f32 %v803, %v804
    %v806 = vrot.slane %v805, 1
    %v807 = vmin.f32 %v805, %v806
    %v808 = vadd.f32 %v661, %v793
    %v809 = vadd.f32 %v662, %v800
    %v810 = vadd.f32 %v663, %v807
    %v814 = vcombine.low %v808, %v809
    %v816 = vunpack.c.l.s4 1966171168
    %v817 = vunpack.c.0.s8 %v816
    %v818 = vlaneseq
    %v819 = vshrl.u32 %v818, 7
    %v820 = vsub.s32 %v817, %v819
    %v821 = vrot.slane %v814, %v820
    %v823 = vunpack.c.l.s4 1966171168
    %v824 = vunpack.c.0.s8 %v823
    %v825 = vlaneseq
    %v826 = vshrl.u32 %v825, 7
    %v827 = vsub.s32 %v824, %v826
    %v828 = vrot.slane %v810, %v827
    %v829 = vcombine.low %v821, %v828
    %v831 = vunpack.c.l.s4 1966171168
    %v832 = vunpack.c.0.s8 %v831
    %v833 = vlaneseq
    %v834 = vshrl.u32 %v833, 7
    %v835 = vsub.s32 %v832, %v834
    %v836 = vrot.slane %v829, %v835
    %v838 = vlaneseq
    %vm839 = vcmp.ge.s32.totalorder %v838, 0
    %vm840 = vcmp.lt.s32.totalorder %v838, 384
    %vm841 = vmand %vm839, %vm840
    %842 = vst.msk [vmem:[#allocation5] sm:$0x7] %vm841, %v836
    // Predicated region
    $region10: #{tpu_custom_call.1} parent=1 // pred_check
      _
    $region11: #{tpu_custom_call.1} parent=1 // pred_check_branch
      %844 = sbr.rel (0) target = $region13
    $region12: #{tpu_custom_call.1} parent=1 // pred_region
      %s846 = ssub.s32 48, 48
      %847 = vsyncadd [#allocation4], %s846
      %s849 = sshll.u32 [#allocation5], 4
      %s850 = int_to_ptr.vmem [resolvable:$true] %s849
      %852 = dma.vmem_to_hbm [thread:$0]  %s850, 48, %s1, [#allocation4]
    $region13: #{tpu_custom_call.1} parent=1 // pred_fallthru
      _
    // Predicated region
    $region14: #{tpu_custom_call.1} parent=1 // pred_check
      _
    $region15: #{tpu_custom_call.1} parent=1 // pred_check_branch
      %854 = sbr.rel (0) target = $region17
    $region16: #{tpu_custom_call.1} parent=1 // pred_region
      %855 = dma.done [#allocation4], 48
    $region17: #{tpu_custom_call.1} parent=1 // pred_fallthru
      _
    %856 = vsyncpa [#allocation3], 1
    %857 = vsyncpa [#allocation4], 1

</llo_original>
